<compile_context>
chip_gen: v5e
topology: v5e:2x2
jax: 0.10.0
libtpu: 0.0.40
codegen_flags: <defaults>
</compile_context>

<pallas_src>
import jax
import jax.numpy as jnp
from jax import lax
from jax.experimental import pallas as pl
from jax.experimental.pallas import tpu as pltpu

_LANE = 128
_SUB = 8


def _pad_to(v, m):
    return ((v + m - 1) // m) * m


def _make_s2g_kernel(n_layers, bt, n):
    """Fused: flattened MLP -> batched Gram distances -> lane-dense dists/graphs."""

    def kernel(*refs):
        x_ref = refs[0]                                   # (bt, N, F)
        wb = refs[1:1 + 2 * n_layers]
        dists_ref = refs[1 + 2 * n_layers]                # (bt, N*N) lane-dense
        graphs_ref = refs[2 + 2 * n_layers]               # (bt, N*N) lane-dense

        f = x_ref.shape[-1]
        # Per-element MLP as one flattened matmul chain (M = bt*N rows, much
        # better MXU fill than one tiny N-row matmul per batch element).
        h = x_ref[...].reshape(bt * n, f)
        for li in range(n_layers):
            w = wb[2 * li][...]                           # (in, out)
            b = wb[2 * li + 1][...]                       # (1, out)
            h = jnp.dot(h, w, preferred_element_type=jnp.float32) + b
            if li < n_layers - 1:                         # last ReLU is dropped
                h = jnp.maximum(h, 0.0)
        c = h.shape[-1]
        h3 = h.reshape(bt, n, c)

        # One batched Gram contraction (replaces the unrolled per-batch loop).
        gram = lax.dot_general(h3, h3, (((2,), (2,)), ((0,), (0,))),
                               preferred_element_type=jnp.float32)   # (bt,N,N)

        # ||h_i||^2 = diag(gram): iota-eye mask + reductions (XLU slot); no
        # ones-matmul, no extra elementwise square, no transposes.
        eye = (lax.broadcasted_iota(jnp.int32, (bt, n, n), 1) ==
               lax.broadcasted_iota(jnp.int32, (bt, n, n), 2))
        g_diag = jnp.where(eye, gram, 0.0)
        r_col = jnp.sum(g_diag, axis=2, keepdims=True)    # (bt, N, 1): ||h_i||^2
        r_row = jnp.sum(g_diag, axis=1, keepdims=True)    # (bt, 1, N): ||h_j||^2
        d = jnp.maximum(r_col + r_row - 2.0 * gram, 0.0)  # (bt, N, N)

        # Lane-dense writeback: flatten each (N, N) matrix into the N*N lane
        # dim of the output block with static lane-slice stores (avoids an
        # unsupported/costly in-kernel (N,N)->(N*N,) reshape relayout).
        for i in range(n):
            row = d[:, i, :]                              # (bt, N)
            dists_ref[:, i * n:(i + 1) * n] = row
            graphs_ref[:, i * n:(i + 1) * n] = jnp.where(
                row <= 1.0, jnp.float32(0.5), jnp.float32(-0.5))

    return kernel


def _vmem_estimate_bytes(bt, n, f, widths):
    """Padded-(8,128)-layout VMEM footprint of one grid step (double-buffered)."""
    f32 = 4
    x_blk = bt * _pad_to(n, _SUB) * _pad_to(f, _LANE) * f32
    out_blk = _pad_to(bt, _SUB) * _pad_to(n * n, _LANE) * f32    # dists; graphs same
    w_res = 0
    last = f
    for w in widths:
        w_res += (_pad_to(last, _SUB) + _SUB) * _pad_to(w, _LANE) * f32
        last = w
    widest = max([f] + list(widths))
    internal = (2 * bt * n * _pad_to(widest, _LANE)              # live MLP activations
                + 2 * bt * _pad_to(n, _SUB) * _pad_to(n, _LANE)) * f32   # gram + d
    return 2 * (x_blk + 2 * out_blk) + 2 * w_res + internal


def set_to_graph_tri_forward(x, gt, weights, tri_key):
    """Forward pass of SetToGraphTri.  Returns (graphs, loss)."""
    B, N, F = x.shape
    n_layers = len(weights)
    widths = [w.shape[1] for w, _ in weights]

    flat_wb = []
    for w, b in weights:
        flat_wb += [w, b]

    # --- batch-block (bt) selection ------------------------------------------
    # Budget safe on every generation: v5e default 16 MiB scoped VMEM,
    # v6e/v7x 32 MiB scoped (v7x only 64 MiB physical); refine with the chip's
    # reported capacity when the query is available.
    budget = 10 * 1024 * 1024
    try:
        budget = min(budget, pltpu.get_tpu_info().vmem_capacity_bytes // 6)
    except Exception:
        pass

    if B <= _SUB:
        bt = B                                            # one full-array block
    else:
        bt = _SUB
        for cand in range(_SUB, min(64, B) + 1, _SUB):    # bt multiple of 8
            if _vmem_estimate_bytes(cand, N, F, widths) <= budget:
                bt = cand
        # keep >= 2 grid steps so both v7x TensorCores get work (free on v5e/v6e)
        bt = min(bt, _pad_to(pl.cdiv(B, 2), _SUB))
    grid_b = pl.cdiv(B, bt)
    B_pad = grid_b * bt
    if B_pad != B:                                        # pad; extra rows discarded
        x = jnp.concatenate([x, jnp.zeros((B_pad - B, N, F), x.dtype)], axis=0)

    in_specs = [pl.BlockSpec((bt, N, F), lambda i: (i, 0, 0))]
    for arr in flat_wb:                                   # weights stay resident
        in_specs.append(pl.BlockSpec(arr.shape, lambda i: (0, 0)))
    out_specs = (pl.BlockSpec((bt, N * N), lambda i: (i, 0)),
                 pl.BlockSpec((bt, N * N), lambda i: (i, 0)))

    dists_flat, graphs_flat = pl.pallas_call(
        _make_s2g_kernel(n_layers, bt, N),
        out_shape=(jax.ShapeDtypeStruct((B_pad, N * N), jnp.float32),
                   jax.ShapeDtypeStruct((B_pad, N * N), jnp.float32)),
        grid=(grid_b,),
        in_specs=in_specs,
        out_specs=out_specs,
        compiler_params=pltpu.CompilerParams(
            dimension_semantics=("parallel",)),
    )(x, *flat_wb)

    # Free wrapper-side layout plumbing back to (B, N, N).
    dists = dists_flat[:B].reshape(B, N, N)
    graphs = graphs_flat[:B].reshape(B, N, N)

    if gt is None:
        return graphs, jnp.float32(0.0)

    # ---- triplet margin loss (plain-JAX glue on the kernel's dists) ----------
    # TODO(synk): torch.randint sampling, dynamic-length filtering and
    # torch.unique(dim=0) have no static-shape Pallas equivalent; done here with
    # masks + sort-dedup (jax RNG stream differs from torch's).
    tri = jax.random.randint(tri_key, (200, 3), 0, N, dtype=jnp.int32)
    a, p, n_ = tri[:, 0], tri[:, 1], tri[:, 2]
    distinct = (a != p) & (a != n_) & (p != n_)
    sentinel = N * N * N

    def per_batch(gt_i, d_i):
        all_same = jnp.all(gt_i == gt_i.reshape(-1)[0])
        valid = distinct & (gt_i[a, p] != 0) & (gt_i[a, n_] == 0)
        code = jnp.where(valid, a * (N * N) + p * N + n_, sentinel)
        code = jnp.sort(code)
        is_first = jnp.concatenate([jnp.array([True]), code[1:] != code[:-1]])
        keep = is_first & (code < sentinel)               # unique valid triplets
        sa = code // (N * N)
        sp = (code // N) % N
        sn = code % N
        vals = jnp.maximum(d_i[sa, sp] - d_i[sa, sn] + 2.0, 0.0)
        cnt = jnp.sum(keep)
        bl = jnp.sum(jnp.where(keep, vals, 0.0)) / jnp.maximum(
            cnt, 1).astype(jnp.float32)
        return jnp.where((cnt > 0) & (~all_same), bl, jnp.float32(0.0))

    loss = jnp.sum(jax.vmap(per_batch)(gt, dists))
    return graphs, loss


def init_params(key, in_features, params):
    """Deterministic synthetic Linear params (torch-style uniform bounds)."""
    weights = []
    last = in_features
    for p in params:
        key, kw, kb = jax.random.split(key, 3)
        bound = 1.0 / (last ** 0.5)
        w = jax.random.uniform(kw, (last, p), jnp.float32, -bound, bound)
        b = jax.random.uniform(kb, (1, p), jnp.float32, -bound, bound)
        weights.append((w, b))
        last = p
    return weights


if __name__ == "__main__":
    key = jax.random.PRNGKey(0)
    k_x, k_gt, k_tri, k_w = jax.random.split(key, 4)

    B, N, F = 2, 16, 2          # batch, set size, in_features
    params = [32, 64, 8]        # hidden widths of the per-element MLP

    x = jax.random.normal(k_x, (B, N, F), dtype=jnp.float32)
    # synthetic ground-truth adjacency (same-cluster indicator)
    labels = jax.random.randint(k_gt, (B, N), 0, 3)
    gt = (labels[:, :, None] == labels[:, None, :]).astype(jnp.float32)

    weights = init_params(k_w, F, params)

    graphs, loss = set_to_graph_tri_forward(x, gt, weights, k_tri)
    jax.block_until_ready((graphs, loss))

    assert graphs.shape == (B, N, N) and graphs.dtype == jnp.float32
    assert loss.shape == () and loss.dtype == jnp.float32
    print("KERNEL_OK")
</pallas_src>

<mosaic_0001>
module attributes {stable_mosaic.version = 11 : i64} {
  func.func @kernel(%arg0: i32, %arg1: memref<2x16x2xf32, #tpu.memory_space<vmem>>, %arg2: memref<2x32xf32, #tpu.memory_space<vmem>>, %arg3: memref<1x32xf32, #tpu.memory_space<vmem>>, %arg4: memref<32x64xf32, #tpu.memory_space<vmem>>, %arg5: memref<1x64xf32, #tpu.memory_space<vmem>>, %arg6: memref<64x8xf32, #tpu.memory_space<vmem>>, %arg7: memref<1x8xf32, #tpu.memory_space<vmem>>, %arg8: memref<2x256xf32, #tpu.memory_space<vmem>>, %arg9: memref<2x256xf32, #tpu.memory_space<vmem>>) attributes {dimension_semantics = [#tpu.dimension_semantics<parallel>], iteration_bounds = array<i64: 1>, scalar_prefetch = 0 : i64, scratch_operands = 0 : i64, tpu.core_type = #tpu.core_type<tc>, window_params = [{transform_indices = @transform_0, window_bounds = array<i64: 2, 16, 2>}, {pipeline_mode = #tpu.pipeline_mode<synchronous>, transform_indices = @transform_1, window_bounds = array<i64: 2, 32>}, {pipeline_mode = #tpu.pipeline_mode<synchronous>, transform_indices = @transform_2, window_bounds = array<i64: 1, 32>}, {pipeline_mode = #tpu.pipeline_mode<synchronous>, transform_indices = @transform_3, window_bounds = array<i64: 32, 64>}, {pipeline_mode = #tpu.pipeline_mode<synchronous>, transform_indices = @transform_4, window_bounds = array<i64: 1, 64>}, {pipeline_mode = #tpu.pipeline_mode<synchronous>, transform_indices = @transform_5, window_bounds = array<i64: 64, 8>}, {pipeline_mode = #tpu.pipeline_mode<synchronous>, transform_indices = @transform_6, window_bounds = array<i64: 1, 8>}, {transform_indices = @transform_7, window_bounds = array<i64: 2, 256>}, {transform_indices = @transform_8, window_bounds = array<i64: 2, 256>}]} {
    %c0 = arith.constant 0 : index
    %c0_0 = arith.constant 0 : index
    %c0_1 = arith.constant 0 : index
    %0 = vector.load %arg1[%c0, %c0_0, %c0_1] : memref<2x16x2xf32, #tpu.memory_space<vmem>>, vector<2x16x2xf32>
    %1 = vector.shape_cast %0 : vector<2x16x2xf32> to vector<32x2xf32>
    %c0_2 = arith.constant 0 : index
    %c0_3 = arith.constant 0 : index
    %2 = vector.load %arg2[%c0_2, %c0_3] : memref<2x32xf32, #tpu.memory_space<vmem>>, vector<2x32xf32>
    %c0_4 = arith.constant 0 : index
    %c0_5 = arith.constant 0 : index
    %3 = vector.load %arg3[%c0_4, %c0_5] : memref<1x32xf32, #tpu.memory_space<vmem>>, vector<1x32xf32>
    %cst = arith.constant dense<0.000000e+00> : vector<32x32xf32>
    %4 = tpu.matmul %1, %2, %cst {dimension_numbers = #tpu.dot_dimension_numbers<[1], [0], [0], [1], [0, 0, 1, 1], [], []>} : vector<32x2xf32>, vector<2x32xf32>, vector<32x32xf32> -> vector<32x32xf32>
    %5 = vector.broadcast %3 : vector<1x32xf32> to vector<32x32xf32>
    %6 = arith.addf %4, %5 : vector<32x32xf32>
    %cst_6 = arith.constant 0.000000e+00 : f32
    %7 = vector.broadcast %cst_6 : f32 to vector<32x32xf32>
    %8 = arith.maximumf %6, %7 : vector<32x32xf32>
    %c0_7 = arith.constant 0 : index
    %c0_8 = arith.constant 0 : index
    %9 = vector.load %arg4[%c0_7, %c0_8] : memref<32x64xf32, #tpu.memory_space<vmem>>, vector<32x64xf32>
    %c0_9 = arith.constant 0 : index
    %c0_10 = arith.constant 0 : index
    %10 = vector.load %arg5[%c0_9, %c0_10] : memref<1x64xf32, #tpu.memory_space<vmem>>, vector<1x64xf32>
    %cst_11 = arith.constant dense<0.000000e+00> : vector<32x64xf32>
    %11 = tpu.matmul %8, %9, %cst_11 {dimension_numbers = #tpu.dot_dimension_numbers<[1], [0], [0], [1], [0, 0, 1, 1], [], []>} : vector<32x32xf32>, vector<32x64xf32>, vector<32x64xf32> -> vector<32x64xf32>
    %12 = vector.broadcast %10 : vector<1x64xf32> to vector<32x64xf32>
    %13 = arith.addf %11, %12 : vector<32x64xf32>
    %cst_12 = arith.constant 0.000000e+00 : f32
    %14 = vector.broadcast %cst_12 : f32 to vector<32x64xf32>
    %15 = arith.maximumf %13, %14 : vector<32x64xf32>
    %c0_13 = arith.constant 0 : index
    %c0_14 = arith.constant 0 : index
    %16 = vector.load %arg6[%c0_13, %c0_14] : memref<64x8xf32, #tpu.memory_space<vmem>>, vector<64x8xf32>
    %c0_15 = arith.constant 0 : index
    %c0_16 = arith.constant 0 : index
    %17 = vector.load %arg7[%c0_15, %c0_16] : memref<1x8xf32, #tpu.memory_space<vmem>>, vector<1x8xf32>
    %cst_17 = arith.constant dense<0.000000e+00> : vector<32x8xf32>
    %18 = tpu.matmul %15, %16, %cst_17 {dimension_numbers = #tpu.dot_dimension_numbers<[1], [0], [0], [1], [0, 0, 1, 1], [], []>} : vector<32x64xf32>, vector<64x8xf32>, vector<32x8xf32> -> vector<32x8xf32>
    %19 = vector.broadcast %17 : vector<1x8xf32> to vector<32x8xf32>
    %20 = arith.addf %18, %19 : vector<32x8xf32>
    %21 = vector.shape_cast %20 : vector<32x8xf32> to vector<2x16x8xf32>
    %cst_18 = arith.constant dense<0.000000e+00> : vector<2x16x16xf32>
    %22 = tpu.matmul %21, %21, %cst_18 {dimension_numbers = #tpu.dot_dimension_numbers<[2], [2], [1], [1], [0, 0, 0, 1, 1, 1], [0], [0]>} : vector<2x16x8xf32>, vector<2x16x8xf32>, vector<2x16x16xf32> -> vector<2x16x16xf32>
    %23 = tpu.iota {dimensions = array<i32: 1>} : vector<2x16x16xi32>
    %24 = tpu.iota {dimensions = array<i32: 2>} : vector<2x16x16xi32>
    %25 = arith.cmpi eq, %23, %24 : vector<2x16x16xi32>
    %cst_19 = arith.constant 0.000000e+00 : f32
    %26 = vector.broadcast %cst_19 : f32 to vector<2x16x16xf32>
    %27 = arith.select %25, %22, %26 : vector<2x16x16xi1>, vector<2x16x16xf32>
    %cst_20 = arith.constant dense<0.000000e+00> : vector<2x16xf32>
    %28 = vector.multi_reduction <add>, %27, %cst_20 [2] : vector<2x16x16xf32> to vector<2x16xf32>
    %29 = vector.shape_cast %28 : vector<2x16xf32> to vector<2x16x1xf32>
    %cst_21 = arith.constant dense<0.000000e+00> : vector<2x16xf32>
    %30 = vector.multi_reduction <add>, %27, %cst_21 [1] : vector<2x16x16xf32> to vector<2x16xf32>
    %31 = vector.shape_cast %30 : vector<2x16xf32> to vector<2x1x16xf32>
    %32 = vector.broadcast %29 : vector<2x16x1xf32> to vector<2x16x16xf32>
    %33 = vector.broadcast %31 : vector<2x1x16xf32> to vector<2x16x16xf32>
    %34 = arith.addf %32, %33 : vector<2x16x16xf32>
    %cst_22 = arith.constant 2.000000e+00 : f32
    %35 = vector.broadcast %cst_22 : f32 to vector<2x16x16xf32>
    %36 = arith.mulf %35, %22 : vector<2x16x16xf32>
    %37 = arith.subf %34, %36 : vector<2x16x16xf32>
    %cst_23 = arith.constant 0.000000e+00 : f32
    %38 = vector.broadcast %cst_23 : f32 to vector<2x16x16xf32>
    %39 = arith.maximumf %37, %38 : vector<2x16x16xf32>
    %40 = vector.extract_strided_slice %39 {offsets = [0, 0, 0], sizes = [2, 1, 16], strides = [1, 1, 1]} : vector<2x16x16xf32> to vector<2x1x16xf32>
    %41 = vector.shape_cast %40 : vector<2x1x16xf32> to vector<2x16xf32>
    %c0_24 = arith.constant 0 : index
    %c0_25 = arith.constant 0 : index
    %42 = vector.load %arg8[%c0_24, %c0_25] : memref<2x256xf32, #tpu.memory_space<vmem>>, vector<2x16xf32>
    tpu.vector_store %arg8[%c0_24, %c0_25], %41 {strides = array<i32>} : memref<2x256xf32, #tpu.memory_space<vmem>>, vector<2x16xf32>,
    %cst_26 = arith.constant 1.000000e+00 : f32
    %43 = vector.broadcast %cst_26 : f32 to vector<2x16xf32>
    %44 = arith.cmpf ole, %41, %43 : vector<2x16xf32>
    %cst_27 = arith.constant 5.000000e-01 : f32
    %cst_28 = arith.constant -5.000000e-01 : f32
    %45 = vector.broadcast %cst_27 : f32 to vector<2x16xf32>
    %46 = vector.broadcast %cst_28 : f32 to vector<2x16xf32>
    %47 = arith.select %44, %45, %46 : vector<2x16xi1>, vector<2x16xf32>
    %c0_29 = arith.constant 0 : index
    %c0_30 = arith.constant 0 : index
    %48 = vector.load %arg9[%c0_29, %c0_30] : memref<2x256xf32, #tpu.memory_space<vmem>>, vector<2x16xf32>
    tpu.vector_store %arg9[%c0_29, %c0_30], %47 {strides = array<i32>} : memref<2x256xf32, #tpu.memory_space<vmem>>, vector<2x16xf32>,
    %49 = vector.extract_strided_slice %39 {offsets = [0, 1, 0], sizes = [2, 1, 16], strides = [1, 1, 1]} : vector<2x16x16xf32> to vector<2x1x16xf32>
    %50 = vector.shape_cast %49 : vector<2x1x16xf32> to vector<2x16xf32>
    %c0_31 = arith.constant 0 : index
    %c16 = arith.constant 16 : index
    %51 = vector.load %arg8[%c0_31, %c16] : memref<2x256xf32, #tpu.memory_space<vmem>>, vector<2x16xf32>
    tpu.vector_store %arg8[%c0_31, %c16], %50 {strides = array<i32>} : memref<2x256xf32, #tpu.memory_space<vmem>>, vector<2x16xf32>,
    %cst_32 = arith.constant 1.000000e+00 : f32
    %52 = vector.broadcast %cst_32 : f32 to vector<2x16xf32>
    %53 = arith.cmpf ole, %50, %52 : vector<2x16xf32>
    %cst_33 = arith.constant 5.000000e-01 : f32
    %cst_34 = arith.constant -5.000000e-01 : f32
    %54 = vector.broadcast %cst_33 : f32 to vector<2x16xf32>
    %55 = vector.broadcast %cst_34 : f32 to vector<2x16xf32>
    %56 = arith.select %53, %54, %55 : vector<2x16xi1>, vector<2x16xf32>
    %c0_35 = arith.constant 0 : index
    %c16_36 = arith.constant 16 : index
    %57 = vector.load %arg9[%c0_35, %c16_36] : memref<2x256xf32, #tpu.memory_space<vmem>>, vector<2x16xf32>
    tpu.vector_store %arg9[%c0_35, %c16_36], %56 {strides = array<i32>} : memref<2x256xf32, #tpu.memory_space<vmem>>, vector<2x16xf32>,
    %58 = vector.extract_strided_slice %39 {offsets = [0, 2, 0], sizes = [2, 1, 16], strides = [1, 1, 1]} : vector<2x16x16xf32> to vector<2x1x16xf32>
    %59 = vector.shape_cast %58 : vector<2x1x16xf32> to vector<2x16xf32>
    %c0_37 = arith.constant 0 : index
    %c32 = arith.constant 32 : index
    %60 = vector.load %arg8[%c0_37, %c32] : memref<2x256xf32, #tpu.memory_space<vmem>>, vector<2x16xf32>
    tpu.vector_store %arg8[%c0_37, %c32], %59 {strides = array<i32>} : memref<2x256xf32, #tpu.memory_space<vmem>>, vector<2x16xf32>,
    %cst_38 = arith.constant 1.000000e+00 : f32
    %61 = vector.broadcast %cst_38 : f32 to vector<2x16xf32>
    %62 = arith.cmpf ole, %59, %61 : vector<2x16xf32>
    %cst_39 = arith.constant 5.000000e-01 : f32
    %cst_40 = arith.constant -5.000000e-01 : f32
    %63 = vector.broadcast %cst_39 : f32 to vector<2x16xf32>
    %64 = vector.broadcast %cst_40 : f32 to vector<2x16xf32>
    %65 = arith.select %62, %63, %64 : vector<2x16xi1>, vector<2x16xf32>
    %c0_41 = arith.constant 0 : index
    %c32_42 = arith.constant 32 : index
    %66 = vector.load %arg9[%c0_41, %c32_42] : memref<2x256xf32, #tpu.memory_space<vmem>>, vector<2x16xf32>
    tpu.vector_store %arg9[%c0_41, %c32_42], %65 {strides = array<i32>} : memref<2x256xf32, #tpu.memory_space<vmem>>, vector<2x16xf32>,
    %67 = vector.extract_strided_slice %39 {offsets = [0, 3, 0], sizes = [2, 1, 16], strides = [1, 1, 1]} : vector<2x16x16xf32> to vector<2x1x16xf32>
    %68 = vector.shape_cast %67 : vector<2x1x16xf32> to vector<2x16xf32>
    %c0_43 = arith.constant 0 : index
    %c48 = arith.constant 48 : index
    %69 = vector.load %arg8[%c0_43, %c48] : memref<2x256xf32, #tpu.memory_space<vmem>>, vector<2x16xf32>
    tpu.vector_store %arg8[%c0_43, %c48], %68 {strides = array<i32>} : memref<2x256xf32, #tpu.memory_space<vmem>>, vector<2x16xf32>,
    %cst_44 = arith.constant 1.000000e+00 : f32
    %70 = vector.broadcast %cst_44 : f32 to vector<2x16xf32>
    %71 = arith.cmpf ole, %68, %70 : vector<2x16xf32>
    %cst_45 = arith.constant 5.000000e-01 : f32
    %cst_46 = arith.constant -5.000000e-01 : f32
    %72 = vector.broadcast %cst_45 : f32 to vector<2x16xf32>
    %73 = vector.broadcast %cst_46 : f32 to vector<2x16xf32>
    %74 = arith.select %71, %72, %73 : vector<2x16xi1>, vector<2x16xf32>
    %c0_47 = arith.constant 0 : index
    %c48_48 = arith.constant 48 : index
    %75 = vector.load %arg9[%c0_47, %c48_48] : memref<2x256xf32, #tpu.memory_space<vmem>>, vector<2x16xf32>
    tpu.vector_store %arg9[%c0_47, %c48_48], %74 {strides = array<i32>} : memref<2x256xf32, #tpu.memory_space<vmem>>, vector<2x16xf32>,
    %76 = vector.extract_strided_slice %39 {offsets = [0, 4, 0], sizes = [2, 1, 16], strides = [1, 1, 1]} : vector<2x16x16xf32> to vector<2x1x16xf32>
    %77 = vector.shape_cast %76 : vector<2x1x16xf32> to vector<2x16xf32>
    %c0_49 = arith.constant 0 : index
    %c64 = arith.constant 64 : index
    %78 = vector.load %arg8[%c0_49, %c64] : memref<2x256xf32, #tpu.memory_space<vmem>>, vector<2x16xf32>
    tpu.vector_store %arg8[%c0_49, %c64], %77 {strides = array<i32>} : memref<2x256xf32, #tpu.memory_space<vmem>>, vector<2x16xf32>,
    %cst_50 = arith.constant 1.000000e+00 : f32
    %79 = vector.broadcast %cst_50 : f32 to vector<2x16xf32>
    %80 = arith.cmpf ole, %77, %79 : vector<2x16xf32>
    %cst_51 = arith.constant 5.000000e-01 : f32
    %cst_52 = arith.constant -5.000000e-01 : f32
    %81 = vector.broadcast %cst_51 : f32 to vector<2x16xf32>
    %82 = vector.broadcast %cst_52 : f32 to vector<2x16xf32>
    %83 = arith.select %80, %81, %82 : vector<2x16xi1>, vector<2x16xf32>
    %c0_53 = arith.constant 0 : index
    %c64_54 = arith.constant 64 : index
    %84 = vector.load %arg9[%c0_53, %c64_54] : memref<2x256xf32, #tpu.memory_space<vmem>>, vector<2x16xf32>
    tpu.vector_store %arg9[%c0_53, %c64_54], %83 {strides = array<i32>} : memref<2x256xf32, #tpu.memory_space<vmem>>, vector<2x16xf32>,
    %85 = vector.extract_strided_slice %39 {offsets = [0, 5, 0], sizes = [2, 1, 16], strides = [1, 1, 1]} : vector<2x16x16xf32> to vector<2x1x16xf32>
    %86 = vector.shape_cast %85 : vector<2x1x16xf32> to vector<2x16xf32>
    %c0_55 = arith.constant 0 : index
    %c80 = arith.constant 80 : index
    %87 = vector.load %arg8[%c0_55, %c80] : memref<2x256xf32, #tpu.memory_space<vmem>>, vector<2x16xf32>
    tpu.vector_store %arg8[%c0_55, %c80], %86 {strides = array<i32>} : memref<2x256xf32, #tpu.memory_space<vmem>>, vector<2x16xf32>,
    %cst_56 = arith.constant 1.000000e+00 : f32
    %88 = vector.broadcast %cst_56 : f32 to vector<2x16xf32>
    %89 = arith.cmpf ole, %86, %88 : vector<2x16xf32>
    %cst_57 = arith.constant 5.000000e-01 : f32
    %cst_58 = arith.constant -5.000000e-01 : f32
    %90 = vector.broadcast %cst_57 : f32 to vector<2x16xf32>
    %91 = vector.broadcast %cst_58 : f32 to vector<2x16xf32>
    %92 = arith.select %89, %90, %91 : vector<2x16xi1>, vector<2x16xf32>
    %c0_59 = arith.constant 0 : index
    %c80_60 = arith.constant 80 : index
    %93 = vector.load %arg9[%c0_59, %c80_60] : memref<2x256xf32, #tpu.memory_space<vmem>>, vector<2x16xf32>
    tpu.vector_store %arg9[%c0_59, %c80_60], %92 {strides = array<i32>} : memref<2x256xf32, #tpu.memory_space<vmem>>, vector<2x16xf32>,
    %94 = vector.extract_strided_slice %39 {offsets = [0, 6, 0], sizes = [2, 1, 16], strides = [1, 1, 1]} : vector<2x16x16xf32> to vector<2x1x16xf32>
    %95 = vector.shape_cast %94 : vector<2x1x16xf32> to vector<2x16xf32>
    %c0_61 = arith.constant 0 : index
    %c96 = arith.constant 96 : index
    %96 = vector.load %arg8[%c0_61, %c96] : memref<2x256xf32, #tpu.memory_space<vmem>>, vector<2x16xf32>
    tpu.vector_store %arg8[%c0_61, %c96], %95 {strides = array<i32>} : memref<2x256xf32, #tpu.memory_space<vmem>>, vector<2x16xf32>,
    %cst_62 = arith.constant 1.000000e+00 : f32
    %97 = vector.broadcast %cst_62 : f32 to vector<2x16xf32>
    %98 = arith.cmpf ole, %95, %97 : vector<2x16xf32>
    %cst_63 = arith.constant 5.000000e-01 : f32
    %cst_64 = arith.constant -5.000000e-01 : f32
    %99 = vector.broadcast %cst_63 : f32 to vector<2x16xf32>
    %100 = vector.broadcast %cst_64 : f32 to vector<2x16xf32>
    %101 = arith.select %98, %99, %100 : vector<2x16xi1>, vector<2x16xf32>
    %c0_65 = arith.constant 0 : index
    %c96_66 = arith.constant 96 : index
    %102 = vector.load %arg9[%c0_65, %c96_66] : memref<2x256xf32, #tpu.memory_space<vmem>>, vector<2x16xf32>
    tpu.vector_store %arg9[%c0_65, %c96_66], %101 {strides = array<i32>} : memref<2x256xf32, #tpu.memory_space<vmem>>, vector<2x16xf32>,
    %103 = vector.extract_strided_slice %39 {offsets = [0, 7, 0], sizes = [2, 1, 16], strides = [1, 1, 1]} : vector<2x16x16xf32> to vector<2x1x16xf32>
    %104 = vector.shape_cast %103 : vector<2x1x16xf32> to vector<2x16xf32>
    %c0_67 = arith.constant 0 : index
    %c112 = arith.constant 112 : index
    %105 = vector.load %arg8[%c0_67, %c112] : memref<2x256xf32, #tpu.memory_space<vmem>>, vector<2x16xf32>
    tpu.vector_store %arg8[%c0_67, %c112], %104 {strides = array<i32>} : memref<2x256xf32, #tpu.memory_space<vmem>>, vector<2x16xf32>,
    %cst_68 = arith.constant 1.000000e+00 : f32
    %106 = vector.broadcast %cst_68 : f32 to vector<2x16xf32>
    %107 = arith.cmpf ole, %104, %106 : vector<2x16xf32>
    %cst_69 = arith.constant 5.000000e-01 : f32
    %cst_70 = arith.constant -5.000000e-01 : f32
    %108 = vector.broadcast %cst_69 : f32 to vector<2x16xf32>
    %109 = vector.broadcast %cst_70 : f32 to vector<2x16xf32>
    %110 = arith.select %107, %108, %109 : vector<2x16xi1>, vector<2x16xf32>
    %c0_71 = arith.constant 0 : index
    %c112_72 = arith.constant 112 : index
    %111 = vector.load %arg9[%c0_71, %c112_72] : memref<2x256xf32, #tpu.memory_space<vmem>>, vector<2x16xf32>
    tpu.vector_store %arg9[%c0_71, %c112_72], %110 {strides = array<i32>} : memref<2x256xf32, #tpu.memory_space<vmem>>, vector<2x16xf32>,
    %112 = vector.extract_strided_slice %39 {offsets = [0, 8, 0], sizes = [2, 1, 16], strides = [1, 1, 1]} : vector<2x16x16xf32> to vector<2x1x16xf32>
    %113 = vector.shape_cast %112 : vector<2x1x16xf32> to vector<2x16xf32>
    %c0_73 = arith.constant 0 : index
    %c128 = arith.constant 128 : index
    %114 = vector.load %arg8[%c0_73, %c128] : memref<2x256xf32, #tpu.memory_space<vmem>>, vector<2x16xf32>
    tpu.vector_store %arg8[%c0_73, %c128], %113 {strides = array<i32>} : memref<2x256xf32, #tpu.memory_space<vmem>>, vector<2x16xf32>,
    %cst_74 = arith.constant 1.000000e+00 : f32
    %115 = vector.broadcast %cst_74 : f32 to vector<2x16xf32>
    %116 = arith.cmpf ole, %113, %115 : vector<2x16xf32>
    %cst_75 = arith.constant 5.000000e-01 : f32
    %cst_76 = arith.constant -5.000000e-01 : f32
    %117 = vector.broadcast %cst_75 : f32 to vector<2x16xf32>
    %118 = vector.broadcast %cst_76 : f32 to vector<2x16xf32>
    %119 = arith.select %116, %117, %118 : vector<2x16xi1>, vector<2x16xf32>
    %c0_77 = arith.constant 0 : index
    %c128_78 = arith.constant 128 : index
    %120 = vector.load %arg9[%c0_77, %c128_78] : memref<2x256xf32, #tpu.memory_space<vmem>>, vector<2x16xf32>
    tpu.vector_store %arg9[%c0_77, %c128_78], %119 {strides = array<i32>} : memref<2x256xf32, #tpu.memory_space<vmem>>, vector<2x16xf32>,
    %121 = vector.extract_strided_slice %39 {offsets = [0, 9, 0], sizes = [2, 1, 16], strides = [1, 1, 1]} : vector<2x16x16xf32> to vector<2x1x16xf32>
    %122 = vector.shape_cast %121 : vector<2x1x16xf32> to vector<2x16xf32>
    %c0_79 = arith.constant 0 : index
    %c144 = arith.constant 144 : index
    %123 = vector.load %arg8[%c0_79, %c144] : memref<2x256xf32, #tpu.memory_space<vmem>>, vector<2x16xf32>
    tpu.vector_store %arg8[%c0_79, %c144], %122 {strides = array<i32>} : memref<2x256xf32, #tpu.memory_space<vmem>>, vector<2x16xf32>,
    %cst_80 = arith.constant 1.000000e+00 : f32
    %124 = vector.broadcast %cst_80 : f32 to vector<2x16xf32>
    %125 = arith.cmpf ole, %122, %124 : vector<2x16xf32>
    %cst_81 = arith.constant 5.000000e-01 : f32
    %cst_82 = arith.constant -5.000000e-01 : f32
    %126 = vector.broadcast %cst_81 : f32 to vector<2x16xf32>
    %127 = vector.broadcast %cst_82 : f32 to vector<2x16xf32>
    %128 = arith.select %125, %126, %127 : vector<2x16xi1>, vector<2x16xf32>
    %c0_83 = arith.constant 0 : index
    %c144_84 = arith.constant 144 : index
    %129 = vector.load %arg9[%c0_83, %c144_84] : memref<2x256xf32, #tpu.memory_space<vmem>>, vector<2x16xf32>
    tpu.vector_store %arg9[%c0_83, %c144_84], %128 {strides = array<i32>} : memref<2x256xf32, #tpu.memory_space<vmem>>, vector<2x16xf32>,
    %130 = vector.extract_strided_slice %39 {offsets = [0, 10, 0], sizes = [2, 1, 16], strides = [1, 1, 1]} : vector<2x16x16xf32> to vector<2x1x16xf32>
    %131 = vector.shape_cast %130 : vector<2x1x16xf32> to vector<2x16xf32>
    %c0_85 = arith.constant 0 : index
    %c160 = arith.constant 160 : index
    %132 = vector.load %arg8[%c0_85, %c160] : memref<2x256xf32, #tpu.memory_space<vmem>>, vector<2x16xf32>
    tpu.vector_store %arg8[%c0_85, %c160], %131 {strides = array<i32>} : memref<2x256xf32, #tpu.memory_space<vmem>>, vector<2x16xf32>,
    %cst_86 = arith.constant 1.000000e+00 : f32
    %133 = vector.broadcast %cst_86 : f32 to vector<2x16xf32>
    %134 = arith.cmpf ole, %131, %133 : vector<2x16xf32>
    %cst_87 = arith.constant 5.000000e-01 : f32
    %cst_88 = arith.constant -5.000000e-01 : f32
    %135 = vector.broadcast %cst_87 : f32 to vector<2x16xf32>
    %136 = vector.broadcast %cst_88 : f32 to vector<2x16xf32>
    %137 = arith.select %134, %135, %136 : vector<2x16xi1>, vector<2x16xf32>
    %c0_89 = arith.constant 0 : index
    %c160_90 = arith.constant 160 : index
    %138 = vector.load %arg9[%c0_89, %c160_90] : memref<2x256xf32, #tpu.memory_space<vmem>>, vector<2x16xf32>
    tpu.vector_store %arg9[%c0_89, %c160_90], %137 {strides = array<i32>} : memref<2x256xf32, #tpu.memory_space<vmem>>, vector<2x16xf32>,
    %139 = vector.extract_strided_slice %39 {offsets = [0, 11, 0], sizes = [2, 1, 16], strides = [1, 1, 1]} : vector<2x16x16xf32> to vector<2x1x16xf32>
    %140 = vector.shape_cast %139 : vector<2x1x16xf32> to vector<2x16xf32>
    %c0_91 = arith.constant 0 : index
    %c176 = arith.constant 176 : index
    %141 = vector.load %arg8[%c0_91, %c176] : memref<2x256xf32, #tpu.memory_space<vmem>>, vector<2x16xf32>
    tpu.vector_store %arg8[%c0_91, %c176], %140 {strides = array<i32>} : memref<2x256xf32, #tpu.memory_space<vmem>>, vector<2x16xf32>,
    %cst_92 = arith.constant 1.000000e+00 : f32
    %142 = vector.broadcast %cst_92 : f32 to vector<2x16xf32>
    %143 = arith.cmpf ole, %140, %142 : vector<2x16xf32>
    %cst_93 = arith.constant 5.000000e-01 : f32
    %cst_94 = arith.constant -5.000000e-01 : f32
    %144 = vector.broadcast %cst_93 : f32 to vector<2x16xf32>
    %145 = vector.broadcast %cst_94 : f32 to vector<2x16xf32>
    %146 = arith.select %143, %144, %145 : vector<2x16xi1>, vector<2x16xf32>
    %c0_95 = arith.constant 0 : index
    %c176_96 = arith.constant 176 : index
    %147 = vector.load %arg9[%c0_95, %c176_96] : memref<2x256xf32, #tpu.memory_space<vmem>>, vector<2x16xf32>
    tpu.vector_store %arg9[%c0_95, %c176_96], %146 {strides = array<i32>} : memref<2x256xf32, #tpu.memory_space<vmem>>, vector<2x16xf32>,
    %148 = vector.extract_strided_slice %39 {offsets = [0, 12, 0], sizes = [2, 1, 16], strides = [1, 1, 1]} : vector<2x16x16xf32> to vector<2x1x16xf32>
    %149 = vector.shape_cast %148 : vector<2x1x16xf32> to vector<2x16xf32>
    %c0_97 = arith.constant 0 : index
    %c192 = arith.constant 192 : index
    %150 = vector.load %arg8[%c0_97, %c192] : memref<2x256xf32, #tpu.memory_space<vmem>>, vector<2x16xf32>
    tpu.vector_store %arg8[%c0_97, %c192], %149 {strides = array<i32>} : memref<2x256xf32, #tpu.memory_space<vmem>>, vector<2x16xf32>,
    %cst_98 = arith.constant 1.000000e+00 : f32
    %151 = vector.broadcast %cst_98 : f32 to vector<2x16xf32>
    %152 = arith.cmpf ole, %149, %151 : vector<2x16xf32>
    %cst_99 = arith.constant 5.000000e-01 : f32
    %cst_100 = arith.constant -5.000000e-01 : f32
    %153 = vector.broadcast %cst_99 : f32 to vector<2x16xf32>
    %154 = vector.broadcast %cst_100 : f32 to vector<2x16xf32>
    %155 = arith.select %152, %153, %154 : vector<2x16xi1>, vector<2x16xf32>
    %c0_101 = arith.constant 0 : index
    %c192_102 = arith.constant 192 : index
    %156 = vector.load %arg9[%c0_101, %c192_102] : memref<2x256xf32, #tpu.memory_space<vmem>>, vector<2x16xf32>
    tpu.vector_store %arg9[%c0_101, %c192_102], %155 {strides = array<i32>} : memref<2x256xf32, #tpu.memory_space<vmem>>, vector<2x16xf32>,
    %157 = vector.extract_strided_slice %39 {offsets = [0, 13, 0], sizes = [2, 1, 16], strides = [1, 1, 1]} : vector<2x16x16xf32> to vector<2x1x16xf32>
    %158 = vector.shape_cast %157 : vector<2x1x16xf32> to vector<2x16xf32>
    %c0_103 = arith.constant 0 : index
    %c208 = arith.constant 208 : index
    %159 = vector.load %arg8[%c0_103, %c208] : memref<2x256xf32, #tpu.memory_space<vmem>>, vector<2x16xf32>
    tpu.vector_store %arg8[%c0_103, %c208], %158 {strides = array<i32>} : memref<2x256xf32, #tpu.memory_space<vmem>>, vector<2x16xf32>,
    %cst_104 = arith.constant 1.000000e+00 : f32
    %160 = vector.broadcast %cst_104 : f32 to vector<2x16xf32>
    %161 = arith.cmpf ole, %158, %160 : vector<2x16xf32>
    %cst_105 = arith.constant 5.000000e-01 : f32
    %cst_106 = arith.constant -5.000000e-01 : f32
    %162 = vector.broadcast %cst_105 : f32 to vector<2x16xf32>
    %163 = vector.broadcast %cst_106 : f32 to vector<2x16xf32>
    %164 = arith.select %161, %162, %163 : vector<2x16xi1>, vector<2x16xf32>
    %c0_107 = arith.constant 0 : index
    %c208_108 = arith.constant 208 : index
    %165 = vector.load %arg9[%c0_107, %c208_108] : memref<2x256xf32, #tpu.memory_space<vmem>>, vector<2x16xf32>
    tpu.vector_store %arg9[%c0_107, %c208_108], %164 {strides = array<i32>} : memref<2x256xf32, #tpu.memory_space<vmem>>, vector<2x16xf32>,
    %166 = vector.extract_strided_slice %39 {offsets = [0, 14, 0], sizes = [2, 1, 16], strides = [1, 1, 1]} : vector<2x16x16xf32> to vector<2x1x16xf32>
    %167 = vector.shape_cast %166 : vector<2x1x16xf32> to vector<2x16xf32>
    %c0_109 = arith.constant 0 : index
    %c224 = arith.constant 224 : index
    %168 = vector.load %arg8[%c0_109, %c224] : memref<2x256xf32, #tpu.memory_space<vmem>>, vector<2x16xf32>
    tpu.vector_store %arg8[%c0_109, %c224], %167 {strides = array<i32>} : memref<2x256xf32, #tpu.memory_space<vmem>>, vector<2x16xf32>,
    %cst_110 = arith.constant 1.000000e+00 : f32
    %169 = vector.broadcast %cst_110 : f32 to vector<2x16xf32>
    %170 = arith.cmpf ole, %167, %169 : vector<2x16xf32>
    %cst_111 = arith.constant 5.000000e-01 : f32
    %cst_112 = arith.constant -5.000000e-01 : f32
    %171 = vector.broadcast %cst_111 : f32 to vector<2x16xf32>
    %172 = vector.broadcast %cst_112 : f32 to vector<2x16xf32>
    %173 = arith.select %170, %171, %172 : vector<2x16xi1>, vector<2x16xf32>
    %c0_113 = arith.constant 0 : index
    %c224_114 = arith.constant 224 : index
    %174 = vector.load %arg9[%c0_113, %c224_114] : memref<2x256xf32, #tpu.memory_space<vmem>>, vector<2x16xf32>
    tpu.vector_store %arg9[%c0_113, %c224_114], %173 {strides = array<i32>} : memref<2x256xf32, #tpu.memory_space<vmem>>, vector<2x16xf32>,
    %175 = vector.extract_strided_slice %39 {offsets = [0, 15, 0], sizes = [2, 1, 16], strides = [1, 1, 1]} : vector<2x16x16xf32> to vector<2x1x16xf32>
    %176 = vector.shape_cast %175 : vector<2x1x16xf32> to vector<2x16xf32>
    %c0_115 = arith.constant 0 : index
    %c240 = arith.constant 240 : index
    %177 = vector.load %arg8[%c0_115, %c240] : memref<2x256xf32, #tpu.memory_space<vmem>>, vector<2x16xf32>
    tpu.vector_store %arg8[%c0_115, %c240], %176 {strides = array<i32>} : memref<2x256xf32, #tpu.memory_space<vmem>>, vector<2x16xf32>,
    %cst_116 = arith.constant 1.000000e+00 : f32
    %178 = vector.broadcast %cst_116 : f32 to vector<2x16xf32>
    %179 = arith.cmpf ole, %176, %178 : vector<2x16xf32>
    %cst_117 = arith.constant 5.000000e-01 : f32
    %cst_118 = arith.constant -5.000000e-01 : f32
    %180 = vector.broadcast %cst_117 : f32 to vector<2x16xf32>
    %181 = vector.broadcast %cst_118 : f32 to vector<2x16xf32>
    %182 = arith.select %179, %180, %181 : vector<2x16xi1>, vector<2x16xf32>
    %c0_119 = arith.constant 0 : index
    %c240_120 = arith.constant 240 : index
    %183 = vector.load %arg9[%c0_119, %c240_120] : memref<2x256xf32, #tpu.memory_space<vmem>>, vector<2x16xf32>
    tpu.vector_store %arg9[%c0_119, %c240_120], %182 {strides = array<i32>} : memref<2x256xf32, #tpu.memory_space<vmem>>, vector<2x16xf32>,
    return
  }
  func.func @transform_0(%arg0: i32) -> (i32, i32, i32) {
    %c0_i32 = arith.constant 0 : i32
    %c0_i32_0 = arith.constant 0 : i32
    %c0_i32_1 = arith.constant 0 : i32
    return %arg0, %c0_i32, %c0_i32_0 : i32, i32, i32
  }
  func.func @transform_1(%arg0: i32) -> (i32, i32) {
    %c0_i32 = arith.constant 0 : i32
    %c0_i32_0 = arith.constant 0 : i32
    %c0_i32_1 = arith.constant 0 : i32
    return %c0_i32, %c0_i32_0 : i32, i32
  }
  func.func @transform_2(%arg0: i32) -> (i32, i32) {
    %c0_i32 = arith.constant 0 : i32
    %c0_i32_0 = arith.constant 0 : i32
    %c0_i32_1 = arith.constant 0 : i32
    return %c0_i32, %c0_i32_0 : i32, i32
  }
  func.func @transform_3(%arg0: i32) -> (i32, i32) {
    %c0_i32 = arith.constant 0 : i32
    %c0_i32_0 = arith.constant 0 : i32
    %c0_i32_1 = arith.constant 0 : i32
    return %c0_i32, %c0_i32_0 : i32, i32
  }
  func.func @transform_4(%arg0: i32) -> (i32, i32) {
    %c0_i32 = arith.constant 0 : i32
    %c0_i32_0 = arith.constant 0 : i32
    %c0_i32_1 = arith.constant 0 : i32
    return %c0_i32, %c0_i32_0 : i32, i32
  }
  func.func @transform_5(%arg0: i32) -> (i32, i32) {
    %c0_i32 = arith.constant 0 : i32
    %c0_i32_0 = arith.constant 0 : i32
    %c0_i32_1 = arith.constant 0 : i32
    return %c0_i32, %c0_i32_0 : i32, i32
  }
  func.func @transform_6(%arg0: i32) -> (i32, i32) {
    %c0_i32 = arith.constant 0 : i32
    %c0_i32_0 = arith.constant 0 : i32
    %c0_i32_1 = arith.constant 0 : i32
    return %c0_i32, %c0_i32_0 : i32, i32
  }
  func.func @transform_7(%arg0: i32) -> (i32, i32) {
    %c0_i32 = arith.constant 0 : i32
    %c0_i32_0 = arith.constant 0 : i32
    return %arg0, %c0_i32 : i32, i32
  }
  func.func @transform_8(%arg0: i32) -> (i32, i32) {
    %c0_i32 = arith.constant 0 : i32
    %c0_i32_0 = arith.constant 0 : i32
    return %arg0, %c0_i32 : i32, i32
  }
}

</mosaic_0001>

<llo_original>
// kernel: tpu_custom_call.1
$region0: #{tpu_custom_call.1}
  #allocation0 [shape = 'u32[]', space=smem, size = 0x4, offset = 0x4, fixed_abs, tag = 'smem constant byte address 0x4 - core index']
  #allocation1 [shape = 'u32[72,128]{1,0:T(1,128)}', space=vmem, size = 0x9000, scoped, tag = 'internal scratch']
  %s0 = inlined_call_operand.vmem [shape: f32[2,16,2], index: 0, kind: input, shape index: {}]
  %s1 = inlined_call_operand.vmem [shape: f32[2,32], index: 1, kind: input, shape index: {}]
  %s2 = inlined_call_operand.vmem [shape: f32[1,32], index: 2, kind: input, shape index: {}]
  %s3 = inlined_call_operand.vmem [shape: f32[32,64], index: 3, kind: input, shape index: {}]
  %s4 = inlined_call_operand.vmem [shape: f32[1,64], index: 4, kind: input, shape index: {}]
  %s5 = inlined_call_operand.vmem [shape: f32[64,8], index: 5, kind: input, shape index: {}]
  %s6 = inlined_call_operand.vmem [shape: f32[1,8], index: 6, kind: input, shape index: {}]
  %s7 = inlined_call_operand.hbm [shape: f32[2,256], index: 7, kind: output, shape index: {0}]
  %s8 = inlined_call_operand.hbm [shape: f32[2,256], index: 8, kind: output, shape index: {1}]
  %9 = xla_tuple %s7, %s8
  %s10 = sld [smem:[#allocation0]]
  $region46: #{tpu_custom_call.1} parent=0
    _
  %s12 = ssub.s32 1, %s10
  %s13 = scalar_select 0, %s12, %s10
  $region1: #{tpu_custom_call.1} parent=0
    #allocation2 [shape = 'u8[2048]{0}', space=vmem, size = 0x800, scoped, tag = 'output window, operand 0, single buffered']
    #allocation3 [shape = 's32[1]{0}', space=sflag, size = 0x4, scoped, tag = 'scoped memory for tpu_custom_call.1']
    #allocation4 [shape = 'u8[2048]{0}', space=vmem, size = 0x800, scoped, tag = 'output window, operand 1, single buffered']
    #allocation5 [shape = 's32[1]{0}', space=sflag, size = 0x4, scoped, tag = 'scoped memory for tpu_custom_call.1']
    %14 = vsyncpa [#allocation3], 0
    %15 = vsyncpa [#allocation5], 0
    // Predicated region
    $region2: #{tpu_custom_call.1} parent=1 // pred_check
      _
    $region3: #{tpu_custom_call.1} parent=1 // pred_check_branch
      %17 = sbr.rel (0) target = $region5
    $region4: #{tpu_custom_call.1} parent=1 // pred_region
      _
    $region5: #{tpu_custom_call.1} parent=1 // pred_fallthru
      _
    // Predicated region
    $region6: #{tpu_custom_call.1} parent=1 // pred_check
      _
    $region7: #{tpu_custom_call.1} parent=1 // pred_check_branch
      %19 = sbr.rel (0) target = $region9
    $region8: #{tpu_custom_call.1} parent=1 // pred_region
      _
    $region9: #{tpu_custom_call.1} parent=1 // pred_fallthru
      _
    // Predicated region
    $region10: #{tpu_custom_call.1} parent=1 // pred_check
      _
    $region11: #{tpu_custom_call.1} parent=1 // pred_check_branch
      %21 = sbr.rel (0) target = $region13
    $region12: #{tpu_custom_call.1} parent=1 // pred_region
      _
    $region13: #{tpu_custom_call.1} parent=1 // pred_fallthru
      _
    // Predicated region
    $region14: #{tpu_custom_call.1} parent=1 // pred_check
      _
    $region15: #{tpu_custom_call.1} parent=1 // pred_check_branch
      %23 = sbr.rel (0) target = $region17
    $region16: #{tpu_custom_call.1} parent=1 // pred_region
      _
    $region17: #{tpu_custom_call.1} parent=1 // pred_fallthru
      _
    // Predicated region
    $region18: #{tpu_custom_call.1} parent=1 // pred_check
      _
    $region19: #{tpu_custom_call.1} parent=1 // pred_check_branch
      %25 = sbr.rel (0) target = $region21
    $region20: #{tpu_custom_call.1} parent=1 // pred_region
      _
    $region21: #{tpu_custom_call.1} parent=1 // pred_fallthru
      _
    // Predicated region
    $region22: #{tpu_custom_call.1} parent=1 // pred_check
      _
    $region23: #{tpu_custom_call.1} parent=1 // pred_check_branch
      %27 = sbr.rel (0) target = $region25
    $region24: #{tpu_custom_call.1} parent=1 // pred_region
      _
    $region25: #{tpu_custom_call.1} parent=1 // pred_fallthru
      _
    // Predicated region
    $region26: #{tpu_custom_call.1} parent=1 // pred_check
      _
    $region27: #{tpu_custom_call.1} parent=1 // pred_check_branch
      %29 = sbr.rel (0) target = $region29
    $region28: #{tpu_custom_call.1} parent=1 // pred_region
      _
    $region29: #{tpu_custom_call.1} parent=1 // pred_fallthru
      _
    %v30 = vld [vmem:[%s0] sm:$0xff]
    %v31 = vld [vmem:[%s0 + $0x8] sm:$0xff]
    %v32 = vld [vmem:[%s0 + $0x10] sm:$0xff]
    %v33 = vld [vmem:[%s0 + $0x18] sm:$0xff]
    %v34 = vld [vmem:[%s1] sm:$0x3]
    %v35 = vld [vmem:[%s2] sm:$0x1]
    %v37 = vperm.slane %v35, 0
    %vm39 = vcmask 15360
    %v41 = vsel %vm39, %v30, 0
    %v44 = vsel %vm39, %v31, 0
    %v47 = vsel %vm39, %v32, 0
    %v50 = vsel %vm39, %v33, 0
    %vm52 = vcmask 1041408
    %v54 = vsel %vm52, %v34, 0
    %56 = vmatpush.msra.mxu0 0.0
    %57 = vmatpush.msra.mxu0 0.0
    %58 = vmatpush.msra.mxu0 0.0
    %59 = vmatpush.msra.mxu0 0.0
    %60 = vmatpush.msra.mxu0 0.0
    %61 = vmatpush.msra.mxu0 0.0
    %62 = vmatpush.msra.mxu0 0.0
    %63 = vmatpush.msra.mxu0 0.0
    %64 = vmatpush.msra.mxu0 0.0
    %65 = vmatpush.msra.mxu0 0.0
    %66 = vmatpush.msra.mxu0 0.0
    %67 = vmatpush.msra.mxu0 0.0
    %68 = vmatpush.msra.mxu0 0.0
    %69 = vmatpush.msra.mxu0 0.0
    %70 = vmatpush.msra.mxu0 0.0
    %71 = vmatpush.msra.mxu0 %v54
    %72 = vmatmul.f32.gmra.mxu0 %v41
    %v73 = vpop.f32.mrf.mxu0
    %v74 = vadd.f32 %v37, %v73
    %75 = vmatmul.f32.gmra.mxu0 %v44
    %v76 = vpop.f32.mrf.mxu0
    %v77 = vadd.f32 %v37, %v76
    %78 = vmatmul.f32.gmra.mxu0 %v47
    %v79 = vpop.f32.mrf.mxu0
    %v80 = vadd.f32 %v37, %v79
    %81 = vmatmul.f32.gmra.mxu0 %v50
    %v82 = vpop.f32.mrf.mxu0
    %v83 = vadd.f32 %v37, %v82
    %84 = vdwg.mxu0
    %v85 = vmax.f32 %v74, 0.0
    %v86 = vmax.f32 %v77, 0.0
    %v87 = vmax.f32 %v80, 0.0
    %v88 = vmax.f32 %v83, 0.0
    %v89 = vld [vmem:[%s3] sm:$0xff]
    %v90 = vld [vmem:[%s3 + $0x8] sm:$0xff]
    %v91 = vld [vmem:[%s3 + $0x10] sm:$0xff]
    %v92 = vld [vmem:[%s3 + $0x18] sm:$0xff]
    %v93 = vld [vmem:[%s4] sm:$0x1]
    %v95 = vperm.slane %v93, 0
    %vm97 = vcmask 261120
    %v99 = vsel %vm97, %v85, 0
    %v102 = vsel %vm97, %v86, 0
    %v105 = vsel %vm97, %v87, 0
    %v108 = vsel %vm97, %v88, 0
    %110 = vmatpush.msra.mxu0 0.0
    %111 = vmatpush.msra.mxu0 0.0
    %112 = vmatpush.msra.mxu0 0.0
    %113 = vmatpush.msra.mxu0 0.0
    %114 = vmatpush.msra.mxu0 0.0
    %115 = vmatpush.msra.mxu0 0.0
    %116 = vmatpush.msra.mxu0 0.0
    %117 = vmatpush.msra.mxu0 0.0
    %118 = vmatpush.msra.mxu0 0.0
    %119 = vmatpush.msra.mxu0 0.0
    %120 = vmatpush.msra.mxu0 0.0
    %121 = vmatpush.msra.mxu0 0.0
    %122 = vmatpush.msra.mxu0 %v92
    %123 = vmatpush.msra.mxu0 %v91
    %124 = vmatpush.msra.mxu0 %v90
    %125 = vmatpush.msra.mxu0 %v89
    %126 = vmatmul.f32.gmra.mxu0 %v99
    %v127 = vpop.f32.mrf.mxu0
    %v128 = vadd.f32 %v95, %v127
    %129 = vmatmul.f32.gmra.mxu0 %v102
    %v130 = vpop.f32.mrf.mxu0
    %v131 = vadd.f32 %v95, %v130
    %132 = vmatmul.f32.gmra.mxu0 %v105
    %v133 = vpop.f32.mrf.mxu0
    %v134 = vadd.f32 %v95, %v133
    %135 = vmatmul.f32.gmra.mxu0 %v108
    %v136 = vpop.f32.mrf.mxu0
    %v137 = vadd.f32 %v95, %v136
    %138 = vdwg.mxu0
    %v139 = vmax.f32 %v128, 0.0
    %v140 = vmax.f32 %v131, 0.0
    %v141 = vmax.f32 %v134, 0.0
    %v142 = vmax.f32 %v137, 0.0
    %v143 = vld [vmem:[%s5] sm:$0xff]
    %v144 = vld [vmem:[%s5 + $0x8] sm:$0xff]
    %v145 = vld [vmem:[%s5 + $0x10] sm:$0xff]
    %v146 = vld [vmem:[%s5 + $0x18] sm:$0xff]
    %v147 = vld [vmem:[%s5 + $0x20] sm:$0xff]
    %v148 = vld [vmem:[%s5 + $0x28] sm:$0xff]
    %v149 = vld [vmem:[%s5 + $0x30] sm:$0xff]
    %v150 = vld [vmem:[%s5 + $0x38] sm:$0xff]
    %v151 = vld [vmem:[%s6] sm:$0x1]
    %v153 = vperm.slane %v151, 0
    %vm155 = vcmask 523264
    %v157 = vsel %vm155, %v139, 0
    %v160 = vsel %vm155, %v140, 0
    %v163 = vsel %vm155, %v141, 0
    %v166 = vsel %vm155, %v142, 0
    %168 = vmatpush.msra.mxu0 0.0
    %169 = vmatpush.msra.mxu0 0.0
    %170 = vmatpush.msra.mxu0 0.0
    %171 = vmatpush.msra.mxu0 0.0
    %172 = vmatpush.msra.mxu0 0.0
    %173 = vmatpush.msra.mxu0 0.0
    %174 = vmatpush.msra.mxu0 0.0
    %175 = vmatpush.msra.mxu0 0.0
    %176 = vmatpush.msra.mxu0 %v150
    %177 = vmatpush.msra.mxu0 %v149
    %178 = vmatpush.msra.mxu0 %v148
    %179 = vmatpush.msra.mxu0 %v147
    %180 = vmatpush.msra.mxu0 %v146
    %181 = vmatpush.msra.mxu0 %v145
    %182 = vmatpush.msra.mxu0 %v144
    %183 = vmatpush.msra.mxu0 %v143
    %184 = vmatmul.f32.gmra.mxu0 %v157
    %v185 = vpop.f32.mrf.mxu0
    %v186 = vadd.f32 %v153, %v185
    %187 = vmatmul.f32.gmra.mxu0 %v160
    %v188 = vpop.f32.mrf.mxu0
    %v189 = vadd.f32 %v153, %v188
    %190 = vmatmul.f32.gmra.mxu0 %v163
    %v191 = vpop.f32.mrf.mxu0
    %v192 = vadd.f32 %v153, %v191
    %193 = vmatmul.f32.gmra.mxu0 %v166
    %v194 = vpop.f32.mrf.mxu0
    %v195 = vadd.f32 %v153, %v194
    %196 = vdwg.mxu0
    %vm197 = vcmask 64512
    %v199 = vsel %vm197, %v186, 0
    %v202 = vsel %vm197, %v189, 0
    %204 = vmatpush.xpose.msra.mxu0 0.0
    %205 = vmatpush.xpose.msra.mxu0 0.0
    %206 = vmatpush.xpose.msra.mxu0 0.0
    %207 = vmatpush.xpose.msra.mxu0 0.0
    %208 = vmatpush.xpose.msra.mxu0 0.0
    %209 = vmatpush.xpose.msra.mxu0 0.0
    %210 = vmatpush.xpose.msra.mxu0 0.0
    %211 = vmatpush.xpose.msra.mxu0 0.0
    %212 = vmatpush.xpose.msra.mxu0 0.0
    %213 = vmatpush.xpose.msra.mxu0 0.0
    %214 = vmatpush.xpose.msra.mxu0 0.0
    %215 = vmatpush.xpose.msra.mxu0 0.0
    %216 = vmatpush.xpose.msra.mxu0 0.0
    %217 = vmatpush.xpose.msra.mxu0 0.0
    %218 = vmatpush.xpose.msra.mxu0 %v202
    %219 = vmatpush.xpose.msra.mxu0 %v199
    %220 = vmatmul.f32.gmra.mxu0 %v199
    %v221 = vpop.f32.mrf.mxu0
    %v222 = vadd.f32 0.0, %v221
    %223 = vmatmul.f32.gmra.mxu0 %v202
    %v224 = vpop.f32.mrf.mxu0
    %v225 = vadd.f32 0.0, %v224
    %226 = vdwg.mxu0
    %v228 = vsel %vm197, %v192, 0
    %v231 = vsel %vm197, %v195, 0
    %233 = vmatpush.xpose.msra.mxu0 0.0
    %234 = vmatpush.xpose.msra.mxu0 0.0
    %235 = vmatpush.xpose.msra.mxu0 0.0
    %236 = vmatpush.xpose.msra.mxu0 0.0
    %237 = vmatpush.xpose.msra.mxu0 0.0
    %238 = vmatpush.xpose.msra.mxu0 0.0
    %239 = vmatpush.xpose.msra.mxu0 0.0
    %240 = vmatpush.xpose.msra.mxu0 0.0
    %241 = vmatpush.xpose.msra.mxu0 0.0
    %242 = vmatpush.xpose.msra.mxu0 0.0
    %243 = vmatpush.xpose.msra.mxu0 0.0
    %244 = vmatpush.xpose.msra.mxu0 0.0
    %245 = vmatpush.xpose.msra.mxu0 0.0
    %246 = vmatpush.xpose.msra.mxu0 0.0
    %247 = vmatpush.xpose.msra.mxu0 %v231
    %248 = vmatpush.xpose.msra.mxu0 %v228
    %249 = vmatmul.f32.gmra.mxu0 %v228
    %v250 = vpop.f32.mrf.mxu0
    %v251 = vadd.f32 0.0, %v250
    %252 = vmatmul.f32.gmra.mxu0 %v231
    %v253 = vpop.f32.mrf.mxu0
    %v254 = vadd.f32 0.0, %v253
    %255 = vdwg.mxu0
    %v256 = vlaneseq
    %v257 = vshrl.u32 %v256, 7
    %v258 = vadd.s32 %v257, 8
    %v259 = vlaneseq
    %v260 = vand.u32 %v259, 127
    %vm261 = vcmp.eq.s32.totalorder %v257, %v260
    %vm262 = vcmp.eq.s32.totalorder %v258, %v260
    %v263 = vsel %vm261, %v222, 0.0
    %v264 = vsel %vm262, %v225, 0.0
    %v265 = vsel %vm261, %v251, 0.0
    %v266 = vsel %vm262, %v254, 0.0
    %vm267 = vcmask 130048
    %v268 = vsel %vm267, %v263, 0.0
    %269 = vadd.xlane.f32.xlu0 %v268
    %v270 = vpop.xlane.xlu0 %269
    %v271 = vsel %vm267, %v264, 0.0
    %272 = vadd.xlane.f32.xlu0 %v271
    %v273 = vpop.xlane.xlu0 %272
    %v274 = vsel %vm267, %v265, 0.0
    %275 = vadd.xlane.f32.xlu0 %v274
    %v276 = vpop.xlane.xlu0 %275
    %v277 = vsel %vm267, %v266, 0.0
    %278 = vadd.xlane.f32.xlu0 %v277
    %v279 = vpop.xlane.xlu0 %278
    %v280 = vadd.f32 %v268, %v271
    %v281 = vrot.slane %v280, 4
    %v282 = vadd.f32 %v280, %v281
    %v283 = vrot.slane %v282, 2
    %v284 = vadd.f32 %v282, %v283
    %v285 = vrot.slane %v284, 1
    %v286 = vadd.f32 %v284, %v285
    %v287 = vadd.f32 %v274, %v277
    %v288 = vrot.slane %v287, 4
    %v289 = vadd.f32 %v287, %v288
    %v290 = vrot.slane %v289, 2
    %v291 = vadd.f32 %v289, %v290
    %v292 = vrot.slane %v291, 1
    %v293 = vadd.f32 %v291, %v292
    %v294 = vadd.f32 %v270, %v286
    %v295 = vadd.f32 %v273, %v286
    %v296 = vadd.f32 %v276, %v293
    %v297 = vadd.f32 %v279, %v293
    %v298 = vmul.f32 %v222, 2.0
    %v299 = vmul.f32 %v225, 2.0
    %v300 = vmul.f32 %v251, 2.0
    %v301 = vmul.f32 %v254, 2.0
    %v302 = vsub.f32 %v294, %v298
    %v303 = vsub.f32 %v295, %v299
    %v304 = vsub.f32 %v296, %v300
    %v305 = vsub.f32 %v297, %v301
    %v306 = vmax.f32 %v302, 0.0
    %v307 = vmax.f32 %v303, 0.0
    %v308 = vmax.f32 %v304, 0.0
    %v309 = vmax.f32 %v305, 0.0
    %vm312 = vcmask 1044484
    %v313 = vsel %vm312, %v306, %v306
    %vm314 = vcmask 1046534
    %v315 = vsel %vm314, %v306, %v313
    %v316 = vrot.slane %v308, 7
    %vm317 = vcmask 1041409
    %v318 = vsel %vm317, %v316, %v315
    %vm319 = vcmask 1043459
    %v320 = vsel %vm319, %v316, %v318
    %vm321 = vcmask 1045509
    %v322 = vsel %vm321, %v316, %v320
    %vm323 = vcmask 1047559
    %v324 = vsel %vm323, %v316, %v322
    %vm326 = vcmask 123904
    %327 = vst.msk [vmem:[#allocation2] sm:$0x3] %vm326, %v324
    %vm328 = vcmp.le.f32.partialorder %v306, 1.0
    %vm329 = vcmp.le.f32.partialorder %v308, 1.0
    %v330 = vsel %vm328, 0.5, -0.5
    %v331 = vsel %vm329, 0.5, -0.5
    %v334 = vsel %vm312, %v330, %v330
    %v335 = vsel %vm314, %v330, %v334
    %v336 = vrot.slane %v331, 7
    %v337 = vsel %vm317, %v336, %v335
    %v338 = vsel %vm319, %v336, %v337
    %v339 = vsel %vm321, %v336, %v338
    %v340 = vsel %vm323, %v336, %v339
    %342 = vst.msk [vmem:[#allocation4] sm:$0x3] %vm326, %v340
    %v343 = vrot.slane %v306, 1
    %v344 = vsel %vm312, %v343, %v343
    %v345 = vsel %vm314, %v343, %v344
    %v346 = vsel %vm317, %v308, %v345
    %v347 = vsel %vm319, %v308, %v346
    %v348 = vsel %vm321, %v308, %v347
    %v349 = vsel %vm323, %v308, %v348
    %350 = vrot.lane.b32.xlu0 %v349, 16
    %v351 = vpop.permute.xlu0 %350
    %vm353 = vcmask 255104
    %354 = vst.msk [vmem:[#allocation2] sm:$0x3] %vm353, %v351
    %v355 = vrot.slane %v330, 1
    %v356 = vsel %vm312, %v355, %v355
    %v357 = vsel %vm314, %v355, %v356
    %v358 = vsel %vm317, %v331, %v357
    %v359 = vsel %vm319, %v331, %v358
    %v360 = vsel %vm321, %v331, %v359
    %v361 = vsel %vm323, %v331, %v360
    %362 = vrot.lane.b32.xlu0 %v361, 16
    %v363 = vpop.permute.xlu0 %362
    %365 = vst.msk [vmem:[#allocation4] sm:$0x3] %vm353, %v363
    %366 = vst.sshfl [vmem:[#allocation1] sm:$0xff pattern:$0x73625140] %v306
    %s367 = scalar_lea.vmem [#allocation1], 1
    %v368 = vld [vmem:[%s367] ss:$4 sm:$0xff]
    %369 = vst.sshfl [vmem:[#allocation1 + $0x20] sm:$0xff pattern:$0x73625140] %v308
    %s370 = scalar_lea.vmem [#allocation1], 33
    %v371 = vld [vmem:[%s370] ss:$4 sm:$0xff]
    %v372 = vsel %vm312, %v368, %v368
    %v373 = vsel %vm314, %v368, %v372
    %v374 = vrot.slane %v371, 7
    %v375 = vsel %vm317, %v374, %v373
    %v376 = vsel %vm319, %v374, %v375
    %v377 = vsel %vm321, %v374, %v376
    %v378 = vsel %vm323, %v374, %v377
    %379 = vrot.lane.b32.xlu0 %v378, 32
    %v380 = vpop.permute.xlu0 %379
    %vm382 = vcmask 386304
    %383 = vst.msk [vmem:[#allocation2] sm:$0x3] %vm382, %v380
    %384 = vst.sshfl [vmem:[#allocation1] sm:$0xff pattern:$0x73625140] %v330
    %s385 = scalar_lea.vmem [#allocation1], 1
    %v386 = vld [vmem:[%s385] ss:$4 sm:$0xff]
    %387 = vst.sshfl [vmem:[#allocation1 + $0x20] sm:$0xff pattern:$0x73625140] %v331
    %s388 = scalar_lea.vmem [#allocation1], 33
    %v389 = vld [vmem:[%s388] ss:$4 sm:$0xff]
    %v390 = vsel %vm312, %v386, %v386
    %v391 = vsel %vm314, %v386, %v390
    %v392 = vrot.slane %v389, 7
    %v393 = vsel %vm317, %v392, %v391
    %v394 = vsel %vm319, %v392, %v393
    %v395 = vsel %vm321, %v392, %v394
    %v396 = vsel %vm323, %v392, %v395
    %397 = vrot.lane.b32.xlu0 %v396, 32
    %v398 = vpop.permute.xlu0 %397
    %400 = vst.msk [vmem:[#allocation4] sm:$0x3] %vm382, %v398
    %401 = vst.sshfl [vmem:[#allocation1] sm:$0xff pattern:$0x73625140] %v306
    %s402 = scalar_lea.vmem [#allocation1], 1
    %v403 = vld [vmem:[%s402] ss:$4 sm:$0xff]
    %404 = vst.sshfl [vmem:[#allocation1 + $0x20] sm:$0xff pattern:$0x73625140] %v308
    %s405 = scalar_lea.vmem [#allocation1], 33
    %v406 = vld [vmem:[%s405] ss:$4 sm:$0xff]
    %v407 = vrot.slane %v403, 1
    %v408 = vsel %vm312, %v407, %v407
    %v409 = vsel %vm314, %v407, %v408
    %v410 = vsel %vm317, %v406, %v409
    %v411 = vsel %vm319, %v406, %v410
    %v412 = vsel %vm321, %v406, %v411
    %v413 = vsel %vm323, %v406, %v412
    %414 = vrot.lane.b32.xlu0 %v413, 48
    %v415 = vpop.permute.xlu0 %414
    %vm417 = vcmask 517504
    %418 = vst.msk [vmem:[#allocation2] sm:$0x3] %vm417, %v415
    %419 = vst.sshfl [vmem:[#allocation1] sm:$0xff pattern:$0x73625140] %v330
    %s420 = scalar_lea.vmem [#allocation1], 1
    %v421 = vld [vmem:[%s420] ss:$4 sm:$0xff]
    %422 = vst.sshfl [vmem:[#allocation1 + $0x20] sm:$0xff pattern:$0x73625140] %v331
    %s423 = scalar_lea.vmem [#allocation1], 33
    %v424 = vld [vmem:[%s423] ss:$4 sm:$0xff]
    %v425 = vrot.slane %v421, 1
    %v426 = vsel %vm312, %v425, %v425
    %v427 = vsel %vm314, %v425, %v426
    %v428 = vsel %vm317, %v424, %v427
    %v429 = vsel %vm319, %v424, %v428
    %v430 = vsel %vm321, %v424, %v429
    %v431 = vsel %vm323, %v424, %v430
    %432 = vrot.lane.b32.xlu0 %v431, 48
    %v433 = vpop.permute.xlu0 %432
    %435 = vst.msk [vmem:[#allocation4] sm:$0x3] %vm417, %v433
    %436 = vst.sshfl [vmem:[#allocation1] sm:$0xff pattern:$0x73625140] %v306
    %s437 = scalar_lea.vmem [#allocation1], 2
    %v438 = vld [vmem:[%s437] ss:$4 sm:$0xff]
    %439 = vst.sshfl [vmem:[#allocation1 + $0x20] sm:$0xff pattern:$0x73625140] %v308
    %s440 = scalar_lea.vmem [#allocation1], 34
    %v441 = vld [vmem:[%s440] ss:$4 sm:$0xff]
    %v442 = vsel %vm312, %v438, %v438
    %v443 = vsel %vm314, %v438, %v442
    %v444 = vrot.slane %v441, 7
    %v445 = vsel %vm317, %v444, %v443
    %v446 = vsel %vm319, %v444, %v445
    %v447 = vsel %vm321, %v444, %v446
    %v448 = vsel %vm323, %v444, %v447
    %449 = vrot.lane.b32.xlu0 %v448, 64
    %v450 = vpop.permute.xlu0 %449
    %vm452 = vcmask 648704
    %453 = vst.msk [vmem:[#allocation2] sm:$0x3] %vm452, %v450
    %454 = vst.sshfl [vmem:[#allocation1] sm:$0xff pattern:$0x73625140] %v330
    %s455 = scalar_lea.vmem [#allocation1], 2
    %v456 = vld [vmem:[%s455] ss:$4 sm:$0xff]
    %457 = vst.sshfl [vmem:[#allocation1 + $0x20] sm:$0xff pattern:$0x73625140] %v331
    %s458 = scalar_lea.vmem [#allocation1], 34
    %v459 = vld [vmem:[%s458] ss:$4 sm:$0xff]
    %v460 = vsel %vm312, %v456, %v456
    %v461 = vsel %vm314, %v456, %v460
    %v462 = vrot.slane %v459, 7
    %v463 = vsel %vm317, %v462, %v461
    %v464 = vsel %vm319, %v462, %v463
    %v465 = vsel %vm321, %v462, %v464
    %v466 = vsel %vm323, %v462, %v465
    %467 = vrot.lane.b32.xlu0 %v466, 64
    %v468 = vpop.permute.xlu0 %467
    %470 = vst.msk [vmem:[#allocation4] sm:$0x3] %vm452, %v468
    %471 = vst.sshfl [vmem:[#allocation1] sm:$0xff pattern:$0x73625140] %v306
    %s472 = scalar_lea.vmem [#allocation1], 2
    %v473 = vld [vmem:[%s472] ss:$4 sm:$0xff]
    %474 = vst.sshfl [vmem:[#allocation1 + $0x20] sm:$0xff pattern:$0x73625140] %v308
    %s475 = scalar_lea.vmem [#allocation1], 34
    %v476 = vld [vmem:[%s475] ss:$4 sm:$0xff]
    %v477 = vrot.slane %v473, 1
    %v478 = vsel %vm312, %v477, %v477
    %v479 = vsel %vm314, %v477, %v478
    %v480 = vsel %vm317, %v476, %v479
    %v481 = vsel %vm319, %v476, %v480
    %v482 = vsel %vm321, %v476, %v481
    %v483 = vsel %vm323, %v476, %v482
    %484 = vrot.lane.b32.xlu0 %v483, 80
    %v485 = vpop.permute.xlu0 %484
    %vm487 = vcmask 779904
    %488 = vst.msk [vmem:[#allocation2] sm:$0x3] %vm487, %v485
    %489 = vst.sshfl [vmem:[#allocation1] sm:$0xff pattern:$0x73625140] %v330
    %s490 = scalar_lea.vmem [#allocation1], 2
    %v491 = vld [vmem:[%s490] ss:$4 sm:$0xff]
    %492 = vst.sshfl [vmem:[#allocation1 + $0x20] sm:$0xff pattern:$0x73625140] %v331
    %s493 = scalar_lea.vmem [#allocation1], 34
    %v494 = vld [vmem:[%s493] ss:$4 sm:$0xff]
    %v495 = vrot.slane %v491, 1
    %v496 = vsel %vm312, %v495, %v495
    %v497 = vsel %vm314, %v495, %v496
    %v498 = vsel %vm317, %v494, %v497
    %v499 = vsel %vm319, %v494, %v498
    %v500 = vsel %vm321, %v494, %v499
    %v501 = vsel %vm323, %v494, %v500
    %502 = vrot.lane.b32.xlu0 %v501, 80
    %v503 = vpop.permute.xlu0 %502
    %505 = vst.msk [vmem:[#allocation4] sm:$0x3] %vm487, %v503
    %506 = vst.sshfl [vmem:[#allocation1] sm:$0xff pattern:$0x73625140] %v306
    %s507 = scalar_lea.vmem [#allocation1], 3
    %v508 = vld [vmem:[%s507] ss:$4 sm:$0xff]
    %509 = vst.sshfl [vmem:[#allocation1 + $0x20] sm:$0xff pattern:$0x73625140] %v308
    %s510 = scalar_lea.vmem [#allocation1], 35
    %v511 = vld [vmem:[%s510] ss:$4 sm:$0xff]
    %v512 = vsel %vm312, %v508, %v508
    %v513 = vsel %vm314, %v508, %v512
    %v514 = vrot.slane %v511, 7
    %v515 = vsel %vm317, %v514, %v513
    %v516 = vsel %vm319, %v514, %v515
    %v517 = vsel %vm321, %v514, %v516
    %v518 = vsel %vm323, %v514, %v517
    %519 = vrot.lane.b32.xlu0 %v518, 96
    %v520 = vpop.permute.xlu0 %519
    %vm522 = vcmask 911104
    %523 = vst.msk [vmem:[#allocation2] sm:$0x3] %vm522, %v520
    %524 = vst.sshfl [vmem:[#allocation1] sm:$0xff pattern:$0x73625140] %v330
    %s525 = scalar_lea.vmem [#allocation1], 3
    %v526 = vld [vmem:[%s525] ss:$4 sm:$0xff]
    %527 = vst.sshfl [vmem:[#allocation1 + $0x20] sm:$0xff pattern:$0x73625140] %v331
    %s528 = scalar_lea.vmem [#allocation1], 35
    %v529 = vld [vmem:[%s528] ss:$4 sm:$0xff]
    %v530 = vsel %vm312, %v526, %v526
    %v531 = vsel %vm314, %v526, %v530
    %v532 = vrot.slane %v529, 7
    %v533 = vsel %vm317, %v532, %v531
    %v534 = vsel %vm319, %v532, %v533
    %v535 = vsel %vm321, %v532, %v534
    %v536 = vsel %vm323, %v532, %v535
    %537 = vrot.lane.b32.xlu0 %v536, 96
    %v538 = vpop.permute.xlu0 %537
    %540 = vst.msk [vmem:[#allocation4] sm:$0x3] %vm522, %v538
    %541 = vst.sshfl [vmem:[#allocation1] sm:$0xff pattern:$0x73625140] %v306
    %s542 = scalar_lea.vmem [#allocation1], 3
    %v543 = vld [vmem:[%s542] ss:$4 sm:$0xff]
    %544 = vst.sshfl [vmem:[#allocation1 + $0x20] sm:$0xff pattern:$0x73625140] %v308
    %s545 = scalar_lea.vmem [#allocation1], 35
    %v546 = vld [vmem:[%s545] ss:$4 sm:$0xff]
    %v547 = vrot.slane %v543, 1
    %v548 = vsel %vm312, %v547, %v547
    %v549 = vsel %vm314, %v547, %v548
    %v550 = vsel %vm317, %v546, %v549
    %v551 = vsel %vm319, %v546, %v550
    %v552 = vsel %vm321, %v546, %v551
    %v553 = vsel %vm323, %v546, %v552
    %554 = vrot.lane.b32.xlu0 %v553, 112
    %v555 = vpop.permute.xlu0 %554
    %vm557 = vcmask 1042304
    %558 = vst.msk [vmem:[#allocation2] sm:$0x3] %vm557, %v555
    %559 = vst.sshfl [vmem:[#allocation1] sm:$0xff pattern:$0x73625140] %v330
    %s560 = scalar_lea.vmem [#allocation1], 3
    %v561 = vld [vmem:[%s560] ss:$4 sm:$0xff]
    %562 = vst.sshfl [vmem:[#allocation1 + $0x20] sm:$0xff pattern:$0x73625140] %v331
    %s563 = scalar_lea.vmem [#allocation1], 35
    %v564 = vld [vmem:[%s563] ss:$4 sm:$0xff]
    %v565 = vrot.slane %v561, 1
    %v566 = vsel %vm312, %v565, %v565
    %v567 = vsel %vm314, %v565, %v566
    %v568 = vsel %vm317, %v564, %v567
    %v569 = vsel %vm319, %v564, %v568
    %v570 = vsel %vm321, %v564, %v569
    %v571 = vsel %vm323, %v564, %v570
    %572 = vrot.lane.b32.xlu0 %v571, 112
    %v573 = vpop.permute.xlu0 %572
    %575 = vst.msk [vmem:[#allocation4] sm:$0x3] %vm557, %v573
    %v578 = vsel %vm312, %v307, %v307
    %v579 = vsel %vm314, %v307, %v578
    %v580 = vrot.slane %v309, 7
    %v581 = vsel %vm317, %v580, %v579
    %v582 = vsel %vm319, %v580, %v581
    %v583 = vsel %vm321, %v580, %v582
    %v584 = vsel %vm323, %v580, %v583
    %586 = vst.msk [vmem:[#allocation2 + $0x2] sm:$0x3] %vm326, %v584
    %vm587 = vcmp.le.f32.partialorder %v307, 1.0
    %vm588 = vcmp.le.f32.partialorder %v309, 1.0
    %v589 = vsel %vm587, 0.5, -0.5
    %v590 = vsel %vm588, 0.5, -0.5
    %v593 = vsel %vm312, %v589, %v589
    %v594 = vsel %vm314, %v589, %v593
    %v595 = vrot.slane %v590, 7
    %v596 = vsel %vm317, %v595, %v594
    %v597 = vsel %vm319, %v595, %v596
    %v598 = vsel %vm321, %v595, %v597
    %v599 = vsel %vm323, %v595, %v598
    %601 = vst.msk [vmem:[#allocation4 + $0x2] sm:$0x3] %vm326, %v599
    %v602 = vrot.slane %v307, 1
    %v603 = vsel %vm312, %v602, %v602
    %v604 = vsel %vm314, %v602, %v603
    %v605 = vsel %vm317, %v309, %v604
    %v606 = vsel %vm319, %v309, %v605
    %v607 = vsel %vm321, %v309, %v606
    %v608 = vsel %vm323, %v309, %v607
    %609 = vrot.lane.b32.xlu0 %v608, 16
    %v610 = vpop.permute.xlu0 %609
    %612 = vst.msk [vmem:[#allocation2 + $0x2] sm:$0x3] %vm353, %v610
    %v613 = vrot.slane %v589, 1
    %v614 = vsel %vm312, %v613, %v613
    %v615 = vsel %vm314, %v613, %v614
    %v616 = vsel %vm317, %v590, %v615
    %v617 = vsel %vm319, %v590, %v616
    %v618 = vsel %vm321, %v590, %v617
    %v619 = vsel %vm323, %v590, %v618
    %620 = vrot.lane.b32.xlu0 %v619, 16
    %v621 = vpop.permute.xlu0 %620
    %623 = vst.msk [vmem:[#allocation4 + $0x2] sm:$0x3] %vm353, %v621
    %624 = vst.sshfl [vmem:[#allocation1] sm:$0xff pattern:$0x73625140] %v307
    %s625 = scalar_lea.vmem [#allocation1], 1
    %v626 = vld [vmem:[%s625] ss:$4 sm:$0xff]
    %627 = vst.sshfl [vmem:[#allocation1 + $0x20] sm:$0xff pattern:$0x73625140] %v309
    %s628 = scalar_lea.vmem [#allocation1], 33
    %v629 = vld [vmem:[%s628] ss:$4 sm:$0xff]
    %v630 = vsel %vm312, %v626, %v626
    %v631 = vsel %vm314, %v626, %v630
    %v632 = vrot.slane %v629, 7
    %v633 = vsel %vm317, %v632, %v631
    %v634 = vsel %vm319, %v632, %v633
    %v635 = vsel %vm321, %v632, %v634
    %v636 = vsel %vm323, %v632, %v635
    %637 = vrot.lane.b32.xlu0 %v636, 32
    %v638 = vpop.permute.xlu0 %637
    %640 = vst.msk [vmem:[#allocation2 + $0x2] sm:$0x3] %vm382, %v638
    %641 = vst.sshfl [vmem:[#allocation1] sm:$0xff pattern:$0x73625140] %v589
    %s642 = scalar_lea.vmem [#allocation1], 1
    %v643 = vld [vmem:[%s642] ss:$4 sm:$0xff]
    %644 = vst.sshfl [vmem:[#allocation1 + $0x20] sm:$0xff pattern:$0x73625140] %v590
    %s645 = scalar_lea.vmem [#allocation1], 33
    %v646 = vld [vmem:[%s645] ss:$4 sm:$0xff]
    %v647 = vsel %vm312, %v643, %v643
    %v648 = vsel %vm314, %v643, %v647
    %v649 = vrot.slane %v646, 7
    %v650 = vsel %vm317, %v649, %v648
    %v651 = vsel %vm319, %v649, %v650
    %v652 = vsel %vm321, %v649, %v651
    %v653 = vsel %vm323, %v649, %v652
    %654 = vrot.lane.b32.xlu0 %v653, 32
    %v655 = vpop.permute.xlu0 %654
    %657 = vst.msk [vmem:[#allocation4 + $0x2] sm:$0x3] %vm382, %v655
    %658 = vst.sshfl [vmem:[#allocation1] sm:$0xff pattern:$0x73625140] %v307
    %s659 = scalar_lea.vmem [#allocation1], 1
    %v660 = vld [vmem:[%s659] ss:$4 sm:$0xff]
    %661 = vst.sshfl [vmem:[#allocation1 + $0x20] sm:$0xff pattern:$0x73625140] %v309
    %s662 = scalar_lea.vmem [#allocation1], 33
    %v663 = vld [vmem:[%s662] ss:$4 sm:$0xff]
    %v664 = vrot.slane %v660, 1
    %v665 = vsel %vm312, %v664, %v664
    %v666 = vsel %vm314, %v664, %v665
    %v667 = vsel %vm317, %v663, %v666
    %v668 = vsel %vm319, %v663, %v667
    %v669 = vsel %vm321, %v663, %v668
    %v670 = vsel %vm323, %v663, %v669
    %671 = vrot.lane.b32.xlu0 %v670, 48
    %v672 = vpop.permute.xlu0 %671
    %674 = vst.msk [vmem:[#allocation2 + $0x2] sm:$0x3] %vm417, %v672
    %675 = vst.sshfl [vmem:[#allocation1] sm:$0xff pattern:$0x73625140] %v589
    %s676 = scalar_lea.vmem [#allocation1], 1
    %v677 = vld [vmem:[%s676] ss:$4 sm:$0xff]
    %678 = vst.sshfl [vmem:[#allocation1 + $0x20] sm:$0xff pattern:$0x73625140] %v590
    %s679 = scalar_lea.vmem [#allocation1], 33
    %v680 = vld [vmem:[%s679] ss:$4 sm:$0xff]
    %v681 = vrot.slane %v677, 1
    %v682 = vsel %vm312, %v681, %v681
    %v683 = vsel %vm314, %v681, %v682
    %v684 = vsel %vm317, %v680, %v683
    %v685 = vsel %vm319, %v680, %v684
    %v686 = vsel %vm321, %v680, %v685
    %v687 = vsel %vm323, %v680, %v686
    %688 = vrot.lane.b32.xlu0 %v687, 48
    %v689 = vpop.permute.xlu0 %688
    %691 = vst.msk [vmem:[#allocation4 + $0x2] sm:$0x3] %vm417, %v689
    %692 = vst.sshfl [vmem:[#allocation1] sm:$0xff pattern:$0x73625140] %v307
    %s693 = scalar_lea.vmem [#allocation1], 2
    %v694 = vld [vmem:[%s693] ss:$4 sm:$0xff]
    %695 = vst.sshfl [vmem:[#allocation1 + $0x20] sm:$0xff pattern:$0x73625140] %v309
    %s696 = scalar_lea.vmem [#allocation1], 34
    %v697 = vld [vmem:[%s696] ss:$4 sm:$0xff]
    %v698 = vsel %vm312, %v694, %v694
    %v699 = vsel %vm314, %v694, %v698
    %v700 = vrot.slane %v697, 7
    %v701 = vsel %vm317, %v700, %v699
    %v702 = vsel %vm319, %v700, %v701
    %v703 = vsel %vm321, %v700, %v702
    %v704 = vsel %vm323, %v700, %v703
    %705 = vrot.lane.b32.xlu0 %v704, 64
    %v706 = vpop.permute.xlu0 %705
    %708 = vst.msk [vmem:[#allocation2 + $0x2] sm:$0x3] %vm452, %v706
    %709 = vst.sshfl [vmem:[#allocation1] sm:$0xff pattern:$0x73625140] %v589
    %s710 = scalar_lea.vmem [#allocation1], 2
    %v711 = vld [vmem:[%s710] ss:$4 sm:$0xff]
    %712 = vst.sshfl [vmem:[#allocation1 + $0x20] sm:$0xff pattern:$0x73625140] %v590
    %s713 = scalar_lea.vmem [#allocation1], 34
    %v714 = vld [vmem:[%s713] ss:$4 sm:$0xff]
    %v715 = vsel %vm312, %v711, %v711
    %v716 = vsel %vm314, %v711, %v715
    %v717 = vrot.slane %v714, 7
    %v718 = vsel %vm317, %v717, %v716
    %v719 = vsel %vm319, %v717, %v718
    %v720 = vsel %vm321, %v717, %v719
    %v721 = vsel %vm323, %v717, %v720
    %722 = vrot.lane.b32.xlu0 %v721, 64
    %v723 = vpop.permute.xlu0 %722
    %725 = vst.msk [vmem:[#allocation4 + $0x2] sm:$0x3] %vm452, %v723
    %726 = vst.sshfl [vmem:[#allocation1] sm:$0xff pattern:$0x73625140] %v307
    %s727 = scalar_lea.vmem [#allocation1], 2
    %v728 = vld [vmem:[%s727] ss:$4 sm:$0xff]
    %729 = vst.sshfl [vmem:[#allocation1 + $0x20] sm:$0xff pattern:$0x73625140] %v309
    %s730 = scalar_lea.vmem [#allocation1], 34
    %v731 = vld [vmem:[%s730] ss:$4 sm:$0xff]
    %v732 = vrot.slane %v728, 1
    %v733 = vsel %vm312, %v732, %v732
    %v734 = vsel %vm314, %v732, %v733
    %v735 = vsel %vm317, %v731, %v734
    %v736 = vsel %vm319, %v731, %v735
    %v737 = vsel %vm321, %v731, %v736
    %v738 = vsel %vm323, %v731, %v737
    %739 = vrot.lane.b32.xlu0 %v738, 80
    %v740 = vpop.permute.xlu0 %739
    %742 = vst.msk [vmem:[#allocation2 + $0x2] sm:$0x3] %vm487, %v740
    %743 = vst.sshfl [vmem:[#allocation1] sm:$0xff pattern:$0x73625140] %v589
    %s744 = scalar_lea.vmem [#allocation1], 2
    %v745 = vld [vmem:[%s744] ss:$4 sm:$0xff]
    %746 = vst.sshfl [vmem:[#allocation1 + $0x20] sm:$0xff pattern:$0x73625140] %v590
    %s747 = scalar_lea.vmem [#allocation1], 34
    %v748 = vld [vmem:[%s747] ss:$4 sm:$0xff]
    %v749 = vrot.slane %v745, 1
    %v750 = vsel %vm312, %v749, %v749
    %v751 = vsel %vm314, %v749, %v750
    %v752 = vsel %vm317, %v748, %v751
    %v753 = vsel %vm319, %v748, %v752
    %v754 = vsel %vm321, %v748, %v753
    %v755 = vsel %vm323, %v748, %v754
    %756 = vrot.lane.b32.xlu0 %v755, 80
    %v757 = vpop.permute.xlu0 %756
    %759 = vst.msk [vmem:[#allocation4 + $0x2] sm:$0x3] %vm487, %v757
    %760 = vst.sshfl [vmem:[#allocation1] sm:$0xff pattern:$0x73625140] %v307
    %s761 = scalar_lea.vmem [#allocation1], 3
    %v762 = vld [vmem:[%s761] ss:$4 sm:$0xff]
    %763 = vst.sshfl [vmem:[#allocation1 + $0x20] sm:$0xff pattern:$0x73625140] %v309
    %s764 = scalar_lea.vmem [#allocation1], 35
    %v765 = vld [vmem:[%s764] ss:$4 sm:$0xff]
    %v766 = vsel %vm312, %v762, %v762
    %v767 = vsel %vm314, %v762, %v766
    %v768 = vrot.slane %v765, 7
    %v769 = vsel %vm317, %v768, %v767
    %v770 = vsel %vm319, %v768, %v769
    %v771 = vsel %vm321, %v768, %v770
    %v772 = vsel %vm323, %v768, %v771
    %773 = vrot.lane.b32.xlu0 %v772, 96
    %v774 = vpop.permute.xlu0 %773
    %776 = vst.msk [vmem:[#allocation2 + $0x2] sm:$0x3] %vm522, %v774
    %777 = vst.sshfl [vmem:[#allocation1] sm:$0xff pattern:$0x73625140] %v589
    %s778 = scalar_lea.vmem [#allocation1], 3
    %v779 = vld [vmem:[%s778] ss:$4 sm:$0xff]
    %780 = vst.sshfl [vmem:[#allocation1 + $0x20] sm:$0xff pattern:$0x73625140] %v590
    %s781 = scalar_lea.vmem [#allocation1], 35
    %v782 = vld [vmem:[%s781] ss:$4 sm:$0xff]
    %v783 = vsel %vm312, %v779, %v779
    %v784 = vsel %vm314, %v779, %v783
    %v785 = vrot.slane %v782, 7
    %v786 = vsel %vm317, %v785, %v784
    %v787 = vsel %vm319, %v785, %v786
    %v788 = vsel %vm321, %v785, %v787
    %v789 = vsel %vm323, %v785, %v788
    %790 = vrot.lane.b32.xlu0 %v789, 96
    %v791 = vpop.permute.xlu0 %790
    %793 = vst.msk [vmem:[#allocation4 + $0x2] sm:$0x3] %vm522, %v791
    %794 = vst.sshfl [vmem:[#allocation1] sm:$0xff pattern:$0x73625140] %v307
    %s795 = scalar_lea.vmem [#allocation1], 3
    %v796 = vld [vmem:[%s795] ss:$4 sm:$0xff]
    %797 = vst.sshfl [vmem:[#allocation1 + $0x20] sm:$0xff pattern:$0x73625140] %v309
    %s798 = scalar_lea.vmem [#allocation1], 35
    %v799 = vld [vmem:[%s798] ss:$4 sm:$0xff]
    %v800 = vrot.slane %v796, 1
    %v801 = vsel %vm312, %v800, %v800
    %v802 = vsel %vm314, %v800, %v801
    %v803 = vsel %vm317, %v799, %v802
    %v804 = vsel %vm319, %v799, %v803
    %v805 = vsel %vm321, %v799, %v804
    %v806 = vsel %vm323, %v799, %v805
    %807 = vrot.lane.b32.xlu0 %v806, 112
    %v808 = vpop.permute.xlu0 %807
    %810 = vst.msk [vmem:[#allocation2 + $0x2] sm:$0x3] %vm557, %v808
    %811 = vst.sshfl [vmem:[#allocation1] sm:$0xff pattern:$0x73625140] %v589
    %s812 = scalar_lea.vmem [#allocation1], 3
    %v813 = vld [vmem:[%s812] ss:$4 sm:$0xff]
    %814 = vst.sshfl [vmem:[#allocation1 + $0x20] sm:$0xff pattern:$0x73625140] %v590
    %s815 = scalar_lea.vmem [#allocation1], 35
    %v816 = vld [vmem:[%s815] ss:$4 sm:$0xff]
    %v817 = vrot.slane %v813, 1
    %v818 = vsel %vm312, %v817, %v817
    %v819 = vsel %vm314, %v817, %v818
    %v820 = vsel %vm317, %v816, %v819
    %v821 = vsel %vm319, %v816, %v820
    %v822 = vsel %vm321, %v816, %v821
    %v823 = vsel %vm323, %v816, %v822
    %824 = vrot.lane.b32.xlu0 %v823, 112
    %v825 = vpop.permute.xlu0 %824
    %827 = vst.msk [vmem:[#allocation4 + $0x2] sm:$0x3] %vm557, %v825
    // Predicated region
    $region30: #{tpu_custom_call.1} parent=1 // pred_check
      _
    $region31: #{tpu_custom_call.1} parent=1 // pred_check_branch
      %829 = sbr.rel (0) target = $region33
    $region32: #{tpu_custom_call.1} parent=1 // pred_region
      %831 = vsyncadd [#allocation3], 0
      %s833 = sshll.u32 [#allocation2], 4
      %s834 = int_to_ptr.vmem [resolvable:$true] %s833
      %s835 = sshll.u32 %s7, 4
      %s836 = int_to_ptr.hbm [resolvable:$true] %s835
      %838 = dma.vmem_to_hbm [thread:$0]  %s834, 64, %s836, [#allocation3]
    $region33: #{tpu_custom_call.1} parent=1 // pred_fallthru
      _
    // Predicated region
    $region34: #{tpu_custom_call.1} parent=1 // pred_check
      _
    $region35: #{tpu_custom_call.1} parent=1 // pred_check_branch
      %840 = sbr.rel (0) target = $region37
    $region36: #{tpu_custom_call.1} parent=1 // pred_region
      %842 = vsyncadd [#allocation5], 0
      %s844 = sshll.u32 [#allocation4], 4
      %s845 = int_to_ptr.vmem [resolvable:$true] %s844
      %s846 = sshll.u32 %s8, 4
      %s847 = int_to_ptr.hbm [resolvable:$true] %s846
      %849 = dma.vmem_to_hbm [thread:$0]  %s845, 64, %s847, [#allocation5]
    $region37: #{tpu_custom_call.1} parent=1 // pred_fallthru
      _
    // Predicated region
    $region38: #{tpu_custom_call.1} parent=1 // pred_check
      _
    $region39: #{tpu_custom_call.1} parent=1 // pred_check_branch
      %851 = sbr.rel (0) target = $region41
    $region40: #{tpu_custom_call.1} parent=1 // pred_region
      %853 = dma.done [#allocation3], 64
    $region41: #{tpu_custom_call.1} parent=1 // pred_fallthru
      _
    // Predicated region
    $region42: #{tpu_custom_call.1} parent=1 // pred_check
      _
    $region43: #{tpu_custom_call.1} parent=1 // pred_check_branch
      %855 = sbr.rel (0) target = $region45
    $region44: #{tpu_custom_call.1} parent=1 // pred_region
      %857 = dma.done [#allocation5], 64
    $region45: #{tpu_custom_call.1} parent=1 // pred_fallthru
      _
    %858 = vsyncpa [#allocation3], 1
    %859 = vsyncpa [#allocation5], 1

</llo_original>
